<compile_context>
chip_gen: v5e
topology: v5e:2x2
jax: 0.10.0
libtpu: 0.0.40
codegen_flags: <defaults>
</compile_context>

<pallas_src>
import jax
import jax.numpy as jnp
from jax.experimental import pallas as pl
from jax.experimental.pallas import tpu as pltpu

_LANE = 128        # TPU lane count (last-dim vector width)
_SUBLANE = 8       # f32 sublane count
_BATCH_TILE = 256  # rows per grid step when the batch is tiled


def _round_up(n, m):
    return ((n + m - 1) // m) * m


# ----------------------------------------------------------------------------
# Fused forward kernel: the whole layer stack runs in one kernel invocation.
# ----------------------------------------------------------------------------
def _make_fused_kernel(plan, eps=1e-5):
    """plan: sequence of layer kinds; parameter refs are consumed in order."""

    def kernel(*refs):
        x_ref, o_ref = refs[0], refs[-1]
        param_refs = refs[1:-1]
        h = x_ref[...].astype(jnp.float32)                     # [TB, Din]
        pi = 0
        for kind in plan:
            if kind == "linear":
                w_ref, b_ref = param_refs[pi], param_refs[pi + 1]
                pi += 2
                # bf16 x bf16 on the MXU, f32 accumulate; epilogue stays f32.
                h = jnp.dot(h.astype(w_ref.dtype), w_ref[...],
                            preferred_element_type=jnp.float32) + b_ref[...]
            elif kind == "relu":
                h = jnp.maximum(h, 0.0)
            elif kind == "sigmoid":
                h = jax.nn.sigmoid(h)
            elif kind == "tanh":
                h = jnp.tanh(h)
            elif kind == "layer_norm":
                g_ref, bt_ref = param_refs[pi], param_refs[pi + 1]
                pi += 2
                mean = jnp.mean(h, axis=-1, keepdims=True)
                var = jnp.mean(jnp.square(h - mean), axis=-1, keepdims=True)
                h = (h - mean) * jax.lax.rsqrt(var + eps) * g_ref[...] + bt_ref[...]
            elif kind == "dropout":
                # TODO(synk): train-mode dropout (RNG mask) not implemented; eval = identity.
                pass
            else:
                raise ValueError(kind)
        o_ref[...] = h.astype(o_ref.dtype)

    return kernel


def _const_index_map(ndim):
    return lambda i: (0,) * ndim


def fused_forward(x2d, kernel, flat_params, out_width):
    """Runs the fused kernel. x2d: [B, Din] f32. Returns [B, out_width] f32."""
    B, Din = x2d.shape
    n_in = 1 + len(flat_params)

    if B <= _BATCH_TILE:
        # Single block, no grid: whole (sublane-padded) batch + all weights in VMEM.
        Bp = _round_up(max(B, _SUBLANE), _SUBLANE)
        xp = jnp.zeros((Bp, Din), jnp.float32).at[:B].set(x2d)
        vmem = pl.BlockSpec(memory_space=pltpu.MemorySpace.VMEM)
        out = pl.pallas_call(
            kernel,
            out_shape=jax.ShapeDtypeStruct((Bp, out_width), jnp.float32),
            in_specs=[vmem] * n_in,
            out_specs=vmem,
        )(xp, *flat_params)
        return out[:B]

    # Large batch: tile a leading "parallel" batch axis (v7x shards across 2 TCs);
    # weights are whole-array blocks re-used by every tile.
    Bp = _round_up(B, _BATCH_TILE)
    xp = jnp.zeros((Bp, Din), jnp.float32).at[:B].set(x2d)
    in_specs = [pl.BlockSpec((_BATCH_TILE, Din), lambda i: (i, 0))]
    for p in flat_params:
        in_specs.append(pl.BlockSpec(p.shape, _const_index_map(p.ndim)))
    out = pl.pallas_call(
        kernel,
        out_shape=jax.ShapeDtypeStruct((Bp, out_width), jnp.float32),
        grid=(Bp // _BATCH_TILE,),
        in_specs=in_specs,
        out_specs=pl.BlockSpec((_BATCH_TILE, out_width), lambda i: (i, 0)),
        compiler_params=pltpu.CompilerParams(dimension_semantics=("parallel",)),
    )(xp, *flat_params)
    return out[:B]


# ----------------------------------------------------------------------------
# Model: mirrors FullyConnectedModel._build_layers / forward
# ----------------------------------------------------------------------------
class FullyConnectedModelPallas:
    def __init__(self, input_size, num_classes, layers_config, seed=0):
        self.input_size = input_size
        self.num_classes = num_classes
        self.layers_config = layers_config
        self.out_width = _round_up(num_classes, _LANE)  # lane-dense classifier slab
        self.plan, self.flat_params = self._init_params(seed)
        self._kernel = _make_fused_kernel(self.plan)

    def _init_params(self, seed):
        key = jax.random.PRNGKey(seed)
        plan, flat = [], []
        prev = self.input_size
        specs = list(self.layers_config) + [{"type": "linear", "size": self.num_classes}]
        last_idx = len(specs) - 1
        for idx, spec in enumerate(specs):
            t = spec["type"]
            if t == "linear":
                out = spec["size"]
                key, kw, kb = jax.random.split(key, 3)
                bound = 1.0 / (prev ** 0.5)  # nn.Linear default init range
                w = jax.random.uniform(kw, (prev, out), jnp.float32, -bound, bound)
                b = jax.random.uniform(kb, (out,), jnp.float32, -bound, bound)
                if idx == last_idx and out != self.out_width:
                    # zero-pad classifier to a lane-dense 128-wide slab
                    w = jnp.zeros((prev, self.out_width), jnp.float32).at[:, :out].set(w)
                    b = jnp.zeros((self.out_width,), jnp.float32).at[:out].set(b)
                flat.append(w.astype(jnp.bfloat16))               # bf16 weights (MXU path)
                flat.append(b.reshape(1, -1).astype(jnp.float32))  # f32 bias, pre-reshaped
                plan.append("linear")
                prev = out
            elif t in ("relu", "sigmoid", "tanh"):
                plan.append(t)
            elif t == "dropout":
                plan.append("dropout")
            elif t == "layer_norm":
                flat.append(jnp.ones((1, prev), jnp.float32))
                flat.append(jnp.zeros((1, prev), jnp.float32))
                plan.append("layer_norm")
            elif t == "batch_norm":
                # TODO(synk): BatchNorm1d (running stats) not implemented.
                raise NotImplementedError("batch_norm not supported in this Pallas port")
            else:
                raise ValueError(f"unknown layer type {t}")
        return plan, flat

    def __call__(self, x):
        x2d = x.reshape(x.shape[0], -1).astype(jnp.float32)   # x.view(B, -1)
        out = fused_forward(x2d, self._kernel, self.flat_params, self.out_width)
        return out[:, : self.num_classes]

    # pure-JAX reference (same bf16-rounded weights/activations at the matmuls)
    def reference(self, x):
        h = x.reshape(x.shape[0], -1).astype(jnp.float32)
        pi = 0
        fp = self.flat_params
        for kind in self.plan:
            if kind == "linear":
                w, b = fp[pi], fp[pi + 1]
                pi += 2
                hb = h.astype(jnp.bfloat16).astype(jnp.float32)
                h = jnp.dot(hb, w.astype(jnp.float32),
                            precision=jax.lax.Precision.HIGHEST) + b
            elif kind == "relu":
                h = jnp.maximum(h, 0.0)
            elif kind == "sigmoid":
                h = jax.nn.sigmoid(h)
            elif kind == "tanh":
                h = jnp.tanh(h)
            elif kind == "layer_norm":
                g, bt = fp[pi], fp[pi + 1]
                pi += 2
                m = jnp.mean(h, -1, keepdims=True)
                v = jnp.mean(jnp.square(h - m), -1, keepdims=True)
                h = (h - m) * jax.lax.rsqrt(v + 1e-5) * g + bt
            elif kind == "dropout":
                pass
        return h[:, : self.num_classes]


if __name__ == "__main__":
    key = jax.random.PRNGKey(0)
    # NCHW input, B=2, C=4, H=W=16 -> flatten to 1024 features (x.view(B, -1))
    x = jax.random.normal(key, (2, 4, 16, 16), dtype=jnp.float32)

    config_layers = [
        {"type": "linear", "size": 128},
        {"type": "relu"},
        {"type": "layer_norm"},
        {"type": "linear", "size": 64},
        {"type": "tanh"},
        {"type": "dropout", "rate": 0.5},
    ]
    model = FullyConnectedModelPallas(
        input_size=4 * 16 * 16, num_classes=10, layers_config=config_layers, seed=0
    )

    # Small batch -> grid-free single-block fused kernel.
    out = jax.block_until_ready(model(x))
    assert out.shape == (2, 10), out.shape
    ref = model.reference(x)
    err = float(jnp.max(jnp.abs(out - ref)))
    assert jnp.allclose(out, ref, atol=2e-3, rtol=2e-3), err

    # Larger batch -> batch-tiled "parallel" grid path (same kernel body).
    xb = jax.random.normal(jax.random.PRNGKey(1), (300, 4, 16, 16), dtype=jnp.float32)
    outb = jax.block_until_ready(model(xb))
    assert outb.shape == (300, 10), outb.shape
    refb = model.reference(xb)
    errb = float(jnp.max(jnp.abs(outb - refb)))
    assert jnp.allclose(outb, refb, atol=2e-3, rtol=2e-3), errb

    print("KERNEL_OK")
</pallas_src>

<mosaic_0001>
module attributes {stable_mosaic.version = 11 : i64} {
  func.func @kernel(%arg0: memref<8x1024xf32, #tpu.memory_space<vmem>>, %arg1: memref<1024x128xbf16, #tpu.memory_space<vmem>>, %arg2: memref<1x128xf32, #tpu.memory_space<vmem>>, %arg3: memref<1x128xf32, #tpu.memory_space<vmem>>, %arg4: memref<1x128xf32, #tpu.memory_space<vmem>>, %arg5: memref<128x64xbf16, #tpu.memory_space<vmem>>, %arg6: memref<1x64xf32, #tpu.memory_space<vmem>>, %arg7: memref<64x128xbf16, #tpu.memory_space<vmem>>, %arg8: memref<1x128xf32, #tpu.memory_space<vmem>>, %arg9: memref<8x128xf32, #tpu.memory_space<vmem>>) attributes {dimension_semantics = [], scalar_prefetch = 0 : i64, scratch_operands = 0 : i64, tpu.core_type = #tpu.core_type<tc>} {
    %c0 = arith.constant 0 : index
    %c0_0 = arith.constant 0 : index
    %0 = vector.load %arg0[%c0, %c0_0] : memref<8x1024xf32, #tpu.memory_space<vmem>>, vector<8x1024xf32>
    %1 = arith.truncf %0 : vector<8x1024xf32> to vector<8x1024xbf16>
    %c0_1 = arith.constant 0 : index
    %c0_2 = arith.constant 0 : index
    %2 = vector.load %arg1[%c0_1, %c0_2] : memref<1024x128xbf16, #tpu.memory_space<vmem>>, vector<1024x128xbf16>
    %cst = arith.constant dense<0.000000e+00> : vector<8x128xf32>
    %3 = tpu.matmul %1, %2, %cst {dimension_numbers = #tpu.dot_dimension_numbers<[1], [0], [0], [1], [0, 0, 1, 1], [], []>} : vector<8x1024xbf16>, vector<1024x128xbf16>, vector<8x128xf32> -> vector<8x128xf32>
    %c0_3 = arith.constant 0 : index
    %c0_4 = arith.constant 0 : index
    %4 = vector.load %arg2[%c0_3, %c0_4] : memref<1x128xf32, #tpu.memory_space<vmem>>, vector<1x128xf32>
    %5 = vector.broadcast %4 : vector<1x128xf32> to vector<8x128xf32>
    %6 = arith.addf %3, %5 : vector<8x128xf32>
    %cst_5 = arith.constant 0.000000e+00 : f32
    %7 = vector.broadcast %cst_5 : f32 to vector<8x128xf32>
    %8 = arith.maximumf %6, %7 : vector<8x128xf32>
    %cst_6 = arith.constant dense<0.000000e+00> : vector<8xf32>
    %9 = vector.multi_reduction <add>, %8, %cst_6 [1] : vector<8x128xf32> to vector<8xf32>
    %10 = vector.shape_cast %9 : vector<8xf32> to vector<8x1xf32>
    %cst_7 = arith.constant 1.280000e+02 : f32
    %11 = vector.broadcast %cst_7 : f32 to vector<8x1xf32>
    %12 = arith.divf %10, %11 : vector<8x1xf32>
    %13 = vector.broadcast %12 : vector<8x1xf32> to vector<8x128xf32>
    %14 = arith.subf %8, %13 : vector<8x128xf32>
    %15 = arith.mulf %14, %14 : vector<8x128xf32>
    %cst_8 = arith.constant dense<0.000000e+00> : vector<8xf32>
    %16 = vector.multi_reduction <add>, %15, %cst_8 [1] : vector<8x128xf32> to vector<8xf32>
    %17 = vector.shape_cast %16 : vector<8xf32> to vector<8x1xf32>
    %cst_9 = arith.constant 1.280000e+02 : f32
    %18 = vector.broadcast %cst_9 : f32 to vector<8x1xf32>
    %19 = arith.divf %17, %18 : vector<8x1xf32>
    %20 = vector.broadcast %12 : vector<8x1xf32> to vector<8x128xf32>
    %21 = arith.subf %8, %20 : vector<8x128xf32>
    %cst_10 = arith.constant 9.99999974E-6 : f32
    %22 = vector.broadcast %cst_10 : f32 to vector<8x1xf32>
    %23 = arith.addf %19, %22 : vector<8x1xf32>
    %24 = math.rsqrt %23 : vector<8x1xf32>
    %25 = vector.broadcast %24 : vector<8x1xf32> to vector<8x128xf32>
    %26 = arith.mulf %21, %25 : vector<8x128xf32>
    %c0_11 = arith.constant 0 : index
    %c0_12 = arith.constant 0 : index
    %27 = vector.load %arg3[%c0_11, %c0_12] : memref<1x128xf32, #tpu.memory_space<vmem>>, vector<1x128xf32>
    %28 = vector.broadcast %27 : vector<1x128xf32> to vector<8x128xf32>
    %29 = arith.mulf %26, %28 : vector<8x128xf32>
    %c0_13 = arith.constant 0 : index
    %c0_14 = arith.constant 0 : index
    %30 = vector.load %arg4[%c0_13, %c0_14] : memref<1x128xf32, #tpu.memory_space<vmem>>, vector<1x128xf32>
    %31 = vector.broadcast %30 : vector<1x128xf32> to vector<8x128xf32>
    %32 = arith.addf %29, %31 : vector<8x128xf32>
    %33 = arith.truncf %32 : vector<8x128xf32> to vector<8x128xbf16>
    %c0_15 = arith.constant 0 : index
    %c0_16 = arith.constant 0 : index
    %34 = vector.load %arg5[%c0_15, %c0_16] : memref<128x64xbf16, #tpu.memory_space<vmem>>, vector<128x64xbf16>
    %cst_17 = arith.constant dense<0.000000e+00> : vector<8x64xf32>
    %35 = tpu.matmul %33, %34, %cst_17 {dimension_numbers = #tpu.dot_dimension_numbers<[1], [0], [0], [1], [0, 0, 1, 1], [], []>} : vector<8x128xbf16>, vector<128x64xbf16>, vector<8x64xf32> -> vector<8x64xf32>
    %c0_18 = arith.constant 0 : index
    %c0_19 = arith.constant 0 : index
    %36 = vector.load %arg6[%c0_18, %c0_19] : memref<1x64xf32, #tpu.memory_space<vmem>>, vector<1x64xf32>
    %37 = vector.broadcast %36 : vector<1x64xf32> to vector<8x64xf32>
    %38 = arith.addf %35, %37 : vector<8x64xf32>
    %39 = math.tanh %38 : vector<8x64xf32>
    %40 = arith.truncf %39 : vector<8x64xf32> to vector<8x64xbf16>
    %c0_20 = arith.constant 0 : index
    %c0_21 = arith.constant 0 : index
    %41 = vector.load %arg7[%c0_20, %c0_21] : memref<64x128xbf16, #tpu.memory_space<vmem>>, vector<64x128xbf16>
    %cst_22 = arith.constant dense<0.000000e+00> : vector<8x128xf32>
    %42 = tpu.matmul %40, %41, %cst_22 {dimension_numbers = #tpu.dot_dimension_numbers<[1], [0], [0], [1], [0, 0, 1, 1], [], []>} : vector<8x64xbf16>, vector<64x128xbf16>, vector<8x128xf32> -> vector<8x128xf32>
    %c0_23 = arith.constant 0 : index
    %c0_24 = arith.constant 0 : index
    %43 = vector.load %arg8[%c0_23, %c0_24] : memref<1x128xf32, #tpu.memory_space<vmem>>, vector<1x128xf32>
    %44 = vector.broadcast %43 : vector<1x128xf32> to vector<8x128xf32>
    %45 = arith.addf %42, %44 : vector<8x128xf32>
    %c0_25 = arith.constant 0 : index
    %c0_26 = arith.constant 0 : index
    %46 = vector.load %arg9[%c0_25, %c0_26] : memref<8x128xf32, #tpu.memory_space<vmem>>, vector<8x128xf32>
    tpu.vector_store %arg9[%c0_25, %c0_26], %45 {strides = array<i32>} : memref<8x128xf32, #tpu.memory_space<vmem>>, vector<8x128xf32>,
    return
  }
}

</mosaic_0001>

<llo_original>
// kernel: tpu_custom_call.1
$region0: #{tpu_custom_call.1}
  #allocation0 [shape = 'u32[]', space=smem, size = 0x4, offset = 0x4, fixed_abs, tag = 'smem constant byte address 0x4 - core index']
  #allocation1 [shape = 'u32[72,128]{1,0:T(1,128)}', space=vmem, size = 0x9000, scoped, tag = 'internal scratch']
  %s0 = inlined_call_operand.vmem [shape: f32[8,1024], index: 0, kind: input, shape index: {}]
  %s1 = inlined_call_operand.hbm [shape: bf16[1024,128], index: 1, kind: input, shape index: {}]
  %s2 = inlined_call_operand.vmem [shape: f32[1,128], index: 2, kind: input, shape index: {}]
  %s3 = inlined_call_operand.hbm [shape: f32[1,128], index: 3, kind: input, shape index: {}]
  %s4 = inlined_call_operand.vmem [shape: f32[1,128], index: 4, kind: input, shape index: {}]
  %s5 = inlined_call_operand.vmem [shape: bf16[128,64], index: 5, kind: input, shape index: {}]
  %s6 = inlined_call_operand.vmem [shape: f32[1,64], index: 6, kind: input, shape index: {}]
  %s7 = inlined_call_operand.vmem [shape: bf16[64,128], index: 7, kind: input, shape index: {}]
  %s8 = inlined_call_operand.vmem [shape: f32[1,128], index: 8, kind: input, shape index: {}]
  %s9 = inlined_call_operand.hbm [shape: f32[8,128], index: 9, kind: output, shape index: {}]
  %s10 = sld [smem:[#allocation0]]
  $region54: #{tpu_custom_call.1} parent=0
    _
  %s12 = ssub.s32 1, %s10
  %s13 = scalar_select 0, %s12, %s10
  $region1: #{tpu_custom_call.1} parent=0
    #allocation2 [shape = 'u8[262144]{0}', space=vmem, size = 0x40000, scoped, tag = 'input window, operand 1, single buffered']
    #allocation3 [shape = 's32[1]{0}', space=sflag, size = 0x4, scoped, tag = 'scoped memory for tpu_custom_call.1']
    #allocation4 [shape = 's32[1]{0}', space=sflag, size = 0x4, scoped, tag = 'scoped memory for tpu_custom_call.1']
    #allocation5 [shape = 'u8[512]{0}', space=vmem, size = 0x400, scoped, tag = 'input window, operand 3, single buffered']
    #allocation6 [shape = 's32[1]{0}', space=sflag, size = 0x4, scoped, tag = 'scoped memory for tpu_custom_call.1']
    #allocation7 [shape = 'u8[4096]{0}', space=vmem, size = 0x1000, scoped, tag = 'output window, operand 0, single buffered']
    %14 = vsyncpa [#allocation3], 0
    %15 = vsyncpa [#allocation6], 0
    %16 = vsyncpa [#allocation4], 0
    // Predicated region
    $region2: #{tpu_custom_call.1} parent=1 // pred_check
      _
    $region3: #{tpu_custom_call.1} parent=1 // pred_check_branch
      %18 = sbr.rel (0) target = $region5
    $region4: #{tpu_custom_call.1} parent=1 // pred_region
      _
    $region5: #{tpu_custom_call.1} parent=1 // pred_fallthru
      _
    // Predicated region
    $region6: #{tpu_custom_call.1} parent=1 // pred_check
      _
    $region7: #{tpu_custom_call.1} parent=1 // pred_check_branch
      %20 = sbr.rel (0) target = $region9
    $region8: #{tpu_custom_call.1} parent=1 // pred_region
      %22 = vsyncadd [#allocation3], 0
      %s23 = sshll.u32 %s1, 4
      %s24 = int_to_ptr.hbm [resolvable:$true] %s23
      %s25 = sshll.u32 [#allocation2], 4
      %s26 = int_to_ptr.vmem [resolvable:$true] %s25
      %31 = dma.hbm_to_vmem [thread:$0]  %s24, 8192, %s26, [#allocation3], 64, 64, 4
    $region9: #{tpu_custom_call.1} parent=1 // pred_fallthru
      _
    // Predicated region
    $region10: #{tpu_custom_call.1} parent=1 // pred_check
      _
    $region11: #{tpu_custom_call.1} parent=1 // pred_check_branch
      %33 = sbr.rel (0) target = $region13
    $region12: #{tpu_custom_call.1} parent=1 // pred_region
      _
    $region13: #{tpu_custom_call.1} parent=1 // pred_fallthru
      _
    // Predicated region
    $region14: #{tpu_custom_call.1} parent=1 // pred_check
      _
    $region15: #{tpu_custom_call.1} parent=1 // pred_check_branch
      %35 = sbr.rel (0) target = $region17
    $region16: #{tpu_custom_call.1} parent=1 // pred_region
      %37 = vsyncadd [#allocation6], 0
      %s39 = sshll.u32 %s3, 4
      %s40 = int_to_ptr.hbm [resolvable:$true] %s39
      %s41 = sshll.u32 [#allocation5], 4
      %s42 = int_to_ptr.vmem [resolvable:$true] %s41
      %44 = dma.hbm_to_vmem [thread:$0]  %s40, 16, %s42, [#allocation6]
    $region17: #{tpu_custom_call.1} parent=1 // pred_fallthru
      _
    // Predicated region
    $region18: #{tpu_custom_call.1} parent=1 // pred_check
      _
    $region19: #{tpu_custom_call.1} parent=1 // pred_check_branch
      %46 = sbr.rel (0) target = $region21
    $region20: #{tpu_custom_call.1} parent=1 // pred_region
      _
    $region21: #{tpu_custom_call.1} parent=1 // pred_fallthru
      _
    // Predicated region
    $region22: #{tpu_custom_call.1} parent=1 // pred_check
      _
    $region23: #{tpu_custom_call.1} parent=1 // pred_check_branch
      %48 = sbr.rel (0) target = $region25
    $region24: #{tpu_custom_call.1} parent=1 // pred_region
      _
    $region25: #{tpu_custom_call.1} parent=1 // pred_fallthru
      _
    // Predicated region
    $region26: #{tpu_custom_call.1} parent=1 // pred_check
      _
    $region27: #{tpu_custom_call.1} parent=1 // pred_check_branch
      %50 = sbr.rel (0) target = $region29
    $region28: #{tpu_custom_call.1} parent=1 // pred_region
      _
    $region29: #{tpu_custom_call.1} parent=1 // pred_fallthru
      _
    // Predicated region
    $region30: #{tpu_custom_call.1} parent=1 // pred_check
      _
    $region31: #{tpu_custom_call.1} parent=1 // pred_check_branch
      %52 = sbr.rel (0) target = $region33
    $region32: #{tpu_custom_call.1} parent=1 // pred_region
      _
    $region33: #{tpu_custom_call.1} parent=1 // pred_fallthru
      _
    // Predicated region
    $region34: #{tpu_custom_call.1} parent=1 // pred_check
      _
    $region35: #{tpu_custom_call.1} parent=1 // pred_check_branch
      %54 = sbr.rel (0) target = $region37
    $region36: #{tpu_custom_call.1} parent=1 // pred_region
      _
    $region37: #{tpu_custom_call.1} parent=1 // pred_fallthru
      _
    // Predicated region
    $region38: #{tpu_custom_call.1} parent=1 // pred_check
      _
    $region39: #{tpu_custom_call.1} parent=1 // pred_check_branch
      %56 = sbr.rel (0) target = $region41
    $region40: #{tpu_custom_call.1} parent=1 // pred_region
      %58 = dma.done [#allocation3], 8192
    $region41: #{tpu_custom_call.1} parent=1 // pred_fallthru
      _
    // Predicated region
    $region42: #{tpu_custom_call.1} parent=1 // pred_check
      _
    $region43: #{tpu_custom_call.1} parent=1 // pred_check_branch
      %60 = sbr.rel (0) target = $region45
    $region44: #{tpu_custom_call.1} parent=1 // pred_region
      %62 = dma.done [#allocation6], 16
    $region45: #{tpu_custom_call.1} parent=1 // pred_fallthru
      _
    %v64 = vld [vmem:[%s0] sm:$0xff]
    %v65 = vld [vmem:[%s0 + $0x8] sm:$0xff]
    %v66 = vld [vmem:[%s0 + $0x10] sm:$0xff]
    %v67 = vld [vmem:[%s0 + $0x18] sm:$0xff]
    %v68 = vld [vmem:[%s0 + $0x20] sm:$0xff]
    %v69 = vld [vmem:[%s0 + $0x28] sm:$0xff]
    %v70 = vld [vmem:[%s0 + $0x30] sm:$0xff]
    %v71 = vld [vmem:[%s0 + $0x38] sm:$0xff]
    %v72 = vpack.c.bf16 %v64, %v64
    %v73 = vpack.c.bf16 %v65, %v65
    %v74 = vpack.c.bf16 %v66, %v66
    %v75 = vpack.c.bf16 %v67, %v67
    %v76 = vpack.c.bf16 %v68, %v68
    %v77 = vpack.c.bf16 %v69, %v69
    %v78 = vpack.c.bf16 %v70, %v70
    %v79 = vpack.c.bf16 %v71, %v71
    %v80 = vld [vmem:[#allocation2] sm:$0xf]
    %v81 = vld [vmem:[#allocation2 + $0x4] sm:$0xf]
    %v82 = vld [vmem:[#allocation2 + $0x8] sm:$0xf]
    %v83 = vld [vmem:[#allocation2 + $0xc] sm:$0xf]
    %v84 = vld [vmem:[#allocation2 + $0x10] sm:$0xf]
    %v85 = vld [vmem:[#allocation2 + $0x14] sm:$0xf]
    %v86 = vld [vmem:[#allocation2 + $0x18] sm:$0xf]
    %v87 = vld [vmem:[#allocation2 + $0x1c] sm:$0xf]
    %v88 = vld [vmem:[#allocation2 + $0x20] sm:$0xf]
    %v89 = vld [vmem:[#allocation2 + $0x24] sm:$0xf]
    %v90 = vld [vmem:[#allocation2 + $0x28] sm:$0xf]
    %v91 = vld [vmem:[#allocation2 + $0x2c] sm:$0xf]
    %v92 = vld [vmem:[#allocation2 + $0x30] sm:$0xf]
    %v93 = vld [vmem:[#allocation2 + $0x34] sm:$0xf]
    %v94 = vld [vmem:[#allocation2 + $0x38] sm:$0xf]
    %v95 = vld [vmem:[#allocation2 + $0x3c] sm:$0xf]
    %v96 = vld [vmem:[#allocation2 + $0x40] sm:$0xf]
    %v97 = vld [vmem:[#allocation2 + $0x44] sm:$0xf]
    %v98 = vld [vmem:[#allocation2 + $0x48] sm:$0xf]
    %v99 = vld [vmem:[#allocation2 + $0x4c] sm:$0xf]
    %v100 = vld [vmem:[#allocation2 + $0x50] sm:$0xf]
    %v101 = vld [vmem:[#allocation2 + $0x54] sm:$0xf]
    %v102 = vld [vmem:[#allocation2 + $0x58] sm:$0xf]
    %v103 = vld [vmem:[#allocation2 + $0x5c] sm:$0xf]
    %v104 = vld [vmem:[#allocation2 + $0x60] sm:$0xf]
    %v105 = vld [vmem:[#allocation2 + $0x64] sm:$0xf]
    %v106 = vld [vmem:[#allocation2 + $0x68] sm:$0xf]
    %v107 = vld [vmem:[#allocation2 + $0x6c] sm:$0xf]
    %v108 = vld [vmem:[#allocation2 + $0x70] sm:$0xf]
    %v109 = vld [vmem:[#allocation2 + $0x74] sm:$0xf]
    %v110 = vld [vmem:[#allocation2 + $0x78] sm:$0xf]
    %v111 = vld [vmem:[#allocation2 + $0x7c] sm:$0xf]
    %v112 = vld [vmem:[#allocation2 + $0x80] sm:$0xf]
    %v113 = vld [vmem:[#allocation2 + $0x84] sm:$0xf]
    %v114 = vld [vmem:[#allocation2 + $0x88] sm:$0xf]
    %v115 = vld [vmem:[#allocation2 + $0x8c] sm:$0xf]
    %v116 = vld [vmem:[#allocation2 + $0x90] sm:$0xf]
    %v117 = vld [vmem:[#allocation2 + $0x94] sm:$0xf]
    %v118 = vld [vmem:[#allocation2 + $0x98] sm:$0xf]
    %v119 = vld [vmem:[#allocation2 + $0x9c] sm:$0xf]
    %v120 = vld [vmem:[#allocation2 + $0xa0] sm:$0xf]
    %v121 = vld [vmem:[#allocation2 + $0xa4] sm:$0xf]
    %v122 = vld [vmem:[#allocation2 + $0xa8] sm:$0xf]
    %v123 = vld [vmem:[#allocation2 + $0xac] sm:$0xf]
    %v124 = vld [vmem:[#allocation2 + $0xb0] sm:$0xf]
    %v125 = vld [vmem:[#allocation2 + $0xb4] sm:$0xf]
    %v126 = vld [vmem:[#allocation2 + $0xb8] sm:$0xf]
    %v127 = vld [vmem:[#allocation2 + $0xbc] sm:$0xf]
    %v128 = vld [vmem:[#allocation2 + $0xc0] sm:$0xf]
    %v129 = vld [vmem:[#allocation2 + $0xc4] sm:$0xf]
    %v130 = vld [vmem:[#allocation2 + $0xc8] sm:$0xf]
    %v131 = vld [vmem:[#allocation2 + $0xcc] sm:$0xf]
    %v132 = vld [vmem:[#allocation2 + $0xd0] sm:$0xf]
    %v133 = vld [vmem:[#allocation2 + $0xd4] sm:$0xf]
    %v134 = vld [vmem:[#allocation2 + $0xd8] sm:$0xf]
    %v135 = vld [vmem:[#allocation2 + $0xdc] sm:$0xf]
    %v136 = vld [vmem:[#allocation2 + $0xe0] sm:$0xf]
    %v137 = vld [vmem:[#allocation2 + $0xe4] sm:$0xf]
    %v138 = vld [vmem:[#allocation2 + $0xe8] sm:$0xf]
    %v139 = vld [vmem:[#allocation2 + $0xec] sm:$0xf]
    %v140 = vld [vmem:[#allocation2 + $0xf0] sm:$0xf]
    %v141 = vld [vmem:[#allocation2 + $0xf4] sm:$0xf]
    %v142 = vld [vmem:[#allocation2 + $0xf8] sm:$0xf]
    %v143 = vld [vmem:[#allocation2 + $0xfc] sm:$0xf]
    %v144 = vld [vmem:[#allocation2 + $0x100] sm:$0xf]
    %v145 = vld [vmem:[#allocation2 + $0x104] sm:$0xf]
    %v146 = vld [vmem:[#allocation2 + $0x108] sm:$0xf]
    %v147 = vld [vmem:[#allocation2 + $0x10c] sm:$0xf]
    %v148 = vld [vmem:[#allocation2 + $0x110] sm:$0xf]
    %v149 = vld [vmem:[#allocation2 + $0x114] sm:$0xf]
    %v150 = vld [vmem:[#allocation2 + $0x118] sm:$0xf]
    %v151 = vld [vmem:[#allocation2 + $0x11c] sm:$0xf]
    %v152 = vld [vmem:[#allocation2 + $0x120] sm:$0xf]
    %v153 = vld [vmem:[#allocation2 + $0x124] sm:$0xf]
    %v154 = vld [vmem:[#allocation2 + $0x128] sm:$0xf]
    %v155 = vld [vmem:[#allocation2 + $0x12c] sm:$0xf]
    %v156 = vld [vmem:[#allocation2 + $0x130] sm:$0xf]
    %v157 = vld [vmem:[#allocation2 + $0x134] sm:$0xf]
    %v158 = vld [vmem:[#allocation2 + $0x138] sm:$0xf]
    %v159 = vld [vmem:[#allocation2 + $0x13c] sm:$0xf]
    %v160 = vld [vmem:[#allocation2 + $0x140] sm:$0xf]
    %v161 = vld [vmem:[#allocation2 + $0x144] sm:$0xf]
    %v162 = vld [vmem:[#allocation2 + $0x148] sm:$0xf]
    %v163 = vld [vmem:[#allocation2 + $0x14c] sm:$0xf]
    %v164 = vld [vmem:[#allocation2 + $0x150] sm:$0xf]
    %v165 = vld [vmem:[#allocation2 + $0x154] sm:$0xf]
    %v166 = vld [vmem:[#allocation2 + $0x158] sm:$0xf]
    %v167 = vld [vmem:[#allocation2 + $0x15c] sm:$0xf]
    %v168 = vld [vmem:[#allocation2 + $0x160] sm:$0xf]
    %v169 = vld [vmem:[#allocation2 + $0x164] sm:$0xf]
    %v170 = vld [vmem:[#allocation2 + $0x168] sm:$0xf]
    %v171 = vld [vmem:[#allocation2 + $0x16c] sm:$0xf]
    %v172 = vld [vmem:[#allocation2 + $0x170] sm:$0xf]
    %v173 = vld [vmem:[#allocation2 + $0x174] sm:$0xf]
    %v174 = vld [vmem:[#allocation2 + $0x178] sm:$0xf]
    %v175 = vld [vmem:[#allocation2 + $0x17c] sm:$0xf]
    %v176 = vld [vmem:[#allocation2 + $0x180] sm:$0xf]
    %v177 = vld [vmem:[#allocation2 + $0x184] sm:$0xf]
    %v178 = vld [vmem:[#allocation2 + $0x188] sm:$0xf]
    %v179 = vld [vmem:[#allocation2 + $0x18c] sm:$0xf]
    %v180 = vld [vmem:[#allocation2 + $0x190] sm:$0xf]
    %v181 = vld [vmem:[#allocation2 + $0x194] sm:$0xf]
    %v182 = vld [vmem:[#allocation2 + $0x198] sm:$0xf]
    %v183 = vld [vmem:[#allocation2 + $0x19c] sm:$0xf]
    %v184 = vld [vmem:[#allocation2 + $0x1a0] sm:$0xf]
    %v185 = vld [vmem:[#allocation2 + $0x1a4] sm:$0xf]
    %v186 = vld [vmem:[#allocation2 + $0x1a8] sm:$0xf]
    %v187 = vld [vmem:[#allocation2 + $0x1ac] sm:$0xf]
    %v188 = vld [vmem:[#allocation2 + $0x1b0] sm:$0xf]
    %v189 = vld [vmem:[#allocation2 + $0x1b4] sm:$0xf]
    %v190 = vld [vmem:[#allocation2 + $0x1b8] sm:$0xf]
    %v191 = vld [vmem:[#allocation2 + $0x1bc] sm:$0xf]
    %v192 = vld [vmem:[#allocation2 + $0x1c0] sm:$0xf]
    %v193 = vld [vmem:[#allocation2 + $0x1c4] sm:$0xf]
    %v194 = vld [vmem:[#allocation2 + $0x1c8] sm:$0xf]
    %v195 = vld [vmem:[#allocation2 + $0x1cc] sm:$0xf]
    %v196 = vld [vmem:[#allocation2 + $0x1d0] sm:$0xf]
    %v197 = vld [vmem:[#allocation2 + $0x1d4] sm:$0xf]
    %v198 = vld [vmem:[#allocation2 + $0x1d8] sm:$0xf]
    %v199 = vld [vmem:[#allocation2 + $0x1dc] sm:$0xf]
    %v200 = vld [vmem:[#allocation2 + $0x1e0] sm:$0xf]
    %v201 = vld [vmem:[#allocation2 + $0x1e4] sm:$0xf]
    %v202 = vld [vmem:[#allocation2 + $0x1e8] sm:$0xf]
    %v203 = vld [vmem:[#allocation2 + $0x1ec] sm:$0xf]
    %v204 = vld [vmem:[#allocation2 + $0x1f0] sm:$0xf]
    %v205 = vld [vmem:[#allocation2 + $0x1f4] sm:$0xf]
    %v206 = vld [vmem:[#allocation2 + $0x1f8] sm:$0xf]
    %v207 = vld [vmem:[#allocation2 + $0x1fc] sm:$0xf]
    %v208 = vld [vmem:[%s2] sm:$0x1]
    %v210 = vperm.slane %v208, 0
    %v340 = vunpack.c.l.b16 %v80
    %v341 = vunpack.c.l.b16 %v81
    %v342 = vunpack.c.l.b16 %v82
    %v343 = vunpack.c.l.b16 %v83
    %v344 = vunpack.c.l.b16 %v84
    %v345 = vunpack.c.l.b16 %v85
    %v346 = vunpack.c.l.b16 %v86
    %v347 = vunpack.c.l.b16 %v87
    %v348 = vunpack.c.l.b16 %v88
    %v349 = vunpack.c.l.b16 %v89
    %v350 = vunpack.c.l.b16 %v90
    %v351 = vunpack.c.l.b16 %v91
    %v352 = vunpack.c.l.b16 %v92
    %v353 = vunpack.c.l.b16 %v93
    %v354 = vunpack.c.l.b16 %v94
    %v355 = vunpack.c.l.b16 %v95
    %v356 = vunpack.c.l.b16 %v96
    %v357 = vunpack.c.l.b16 %v97
    %v358 = vunpack.c.l.b16 %v98
    %v359 = vunpack.c.l.b16 %v99
    %v360 = vunpack.c.l.b16 %v100
    %v361 = vunpack.c.l.b16 %v101
    %v362 = vunpack.c.l.b16 %v102
    %v363 = vunpack.c.l.b16 %v103
    %v364 = vunpack.c.l.b16 %v104
    %v365 = vunpack.c.l.b16 %v105
    %v366 = vunpack.c.l.b16 %v106
    %v367 = vunpack.c.l.b16 %v107
    %v368 = vunpack.c.l.b16 %v108
    %v369 = vunpack.c.l.b16 %v109
    %v370 = vunpack.c.l.b16 %v110
    %v371 = vunpack.c.l.b16 %v111
    %v372 = vunpack.c.l.b16 %v112
    %v373 = vunpack.c.l.b16 %v113
    %v374 = vunpack.c.l.b16 %v114
    %v375 = vunpack.c.l.b16 %v115
    %v376 = vunpack.c.l.b16 %v116
    %v377 = vunpack.c.l.b16 %v117
    %v378 = vunpack.c.l.b16 %v118
    %v379 = vunpack.c.l.b16 %v119
    %v380 = vunpack.c.l.b16 %v120
    %v381 = vunpack.c.l.b16 %v121
    %v382 = vunpack.c.l.b16 %v122
    %v383 = vunpack.c.l.b16 %v123
    %v384 = vunpack.c.l.b16 %v124
    %v385 = vunpack.c.l.b16 %v125
    %v386 = vunpack.c.l.b16 %v126
    %v387 = vunpack.c.l.b16 %v127
    %v388 = vunpack.c.l.b16 %v128
    %v389 = vunpack.c.l.b16 %v129
    %v390 = vunpack.c.l.b16 %v130
    %v391 = vunpack.c.l.b16 %v131
    %v392 = vunpack.c.l.b16 %v132
    %v393 = vunpack.c.l.b16 %v133
    %v394 = vunpack.c.l.b16 %v134
    %v395 = vunpack.c.l.b16 %v135
    %v396 = vunpack.c.l.b16 %v136
    %v397 = vunpack.c.l.b16 %v137
    %v398 = vunpack.c.l.b16 %v138
    %v399 = vunpack.c.l.b16 %v139
    %v400 = vunpack.c.l.b16 %v140
    %v401 = vunpack.c.l.b16 %v141
    %v402 = vunpack.c.l.b16 %v142
    %v403 = vunpack.c.l.b16 %v143
    %v404 = vunpack.c.l.b16 %v144
    %v405 = vunpack.c.l.b16 %v145
    %v406 = vunpack.c.l.b16 %v146
    %v407 = vunpack.c.l.b16 %v147
    %v408 = vunpack.c.l.b16 %v148
    %v409 = vunpack.c.l.b16 %v149
    %v410 = vunpack.c.l.b16 %v150
    %v411 = vunpack.c.l.b16 %v151
    %v412 = vunpack.c.l.b16 %v152
    %v413 = vunpack.c.l.b16 %v153
    %v414 = vunpack.c.l.b16 %v154
    %v415 = vunpack.c.l.b16 %v155
    %v416 = vunpack.c.l.b16 %v156
    %v417 = vunpack.c.l.b16 %v157
    %v418 = vunpack.c.l.b16 %v158
    %v419 = vunpack.c.l.b16 %v159
    %v420 = vunpack.c.l.b16 %v160
    %v421 = vunpack.c.l.b16 %v161
    %v422 = vunpack.c.l.b16 %v162
    %v423 = vunpack.c.l.b16 %v163
    %v424 = vunpack.c.l.b16 %v164
    %v425 = vunpack.c.l.b16 %v165
    %v426 = vunpack.c.l.b16 %v166
    %v427 = vunpack.c.l.b16 %v167
    %v428 = vunpack.c.l.b16 %v168
    %v429 = vunpack.c.l.b16 %v169
    %v430 = vunpack.c.l.b16 %v170
    %v431 = vunpack.c.l.b16 %v171
    %v432 = vunpack.c.l.b16 %v172
    %v433 = vunpack.c.l.b16 %v173
    %v434 = vunpack.c.l.b16 %v174
    %v435 = vunpack.c.l.b16 %v175
    %v436 = vunpack.c.l.b16 %v176
    %v437 = vunpack.c.l.b16 %v177
    %v438 = vunpack.c.l.b16 %v178
    %v439 = vunpack.c.l.b16 %v179
    %v440 = vunpack.c.l.b16 %v180
    %v441 = vunpack.c.l.b16 %v181
    %v442 = vunpack.c.l.b16 %v182
    %v443 = vunpack.c.l.b16 %v183
    %v444 = vunpack.c.l.b16 %v184
    %v445 = vunpack.c.l.b16 %v185
    %v446 = vunpack.c.l.b16 %v186
    %v447 = vunpack.c.l.b16 %v187
    %v448 = vunpack.c.l.b16 %v188
    %v449 = vunpack.c.l.b16 %v189
    %v450 = vunpack.c.l.b16 %v190
    %v451 = vunpack.c.l.b16 %v191
    %v452 = vunpack.c.l.b16 %v192
    %v453 = vunpack.c.l.b16 %v193
    %v454 = vunpack.c.l.b16 %v194
    %v455 = vunpack.c.l.b16 %v195
    %v456 = vunpack.c.l.b16 %v196
    %v457 = vunpack.c.l.b16 %v197
    %v458 = vunpack.c.l.b16 %v198
    %v459 = vunpack.c.l.b16 %v199
    %v460 = vunpack.c.l.b16 %v200
    %v461 = vunpack.c.l.b16 %v201
    %v462 = vunpack.c.l.b16 %v202
    %v463 = vunpack.c.l.b16 %v203
    %v464 = vunpack.c.l.b16 %v204
    %v465 = vunpack.c.l.b16 %v205
    %v466 = vunpack.c.l.b16 %v206
    %v467 = vunpack.c.l.b16 %v207
    %v468 = vpack.c.b16 %v341, %v340
    %v469 = vpack.c.b16 %v343, %v342
    %v470 = vpack.c.b16 %v345, %v344
    %v471 = vpack.c.b16 %v347, %v346
    %v472 = vpack.c.b16 %v349, %v348
    %v473 = vpack.c.b16 %v351, %v350
    %v474 = vpack.c.b16 %v353, %v352
    %v475 = vpack.c.b16 %v355, %v354
    %v476 = vpack.c.b16 %v357, %v356
    %v477 = vpack.c.b16 %v359, %v358
    %v478 = vpack.c.b16 %v361, %v360
    %v479 = vpack.c.b16 %v363, %v362
    %v480 = vpack.c.b16 %v365, %v364
    %v481 = vpack.c.b16 %v367, %v366
    %v482 = vpack.c.b16 %v369, %v368
    %v483 = vpack.c.b16 %v371, %v370
    %v484 = vpack.c.b16 %v373, %v372
    %v485 = vpack.c.b16 %v375, %v374
    %v486 = vpack.c.b16 %v377, %v376
    %v487 = vpack.c.b16 %v379, %v378
    %v488 = vpack.c.b16 %v381, %v380
    %v489 = vpack.c.b16 %v383, %v382
    %v490 = vpack.c.b16 %v385, %v384
    %v491 = vpack.c.b16 %v387, %v386
    %v492 = vpack.c.b16 %v389, %v388
    %v493 = vpack.c.b16 %v391, %v390
    %v494 = vpack.c.b16 %v393, %v392
    %v495 = vpack.c.b16 %v395, %v394
    %v496 = vpack.c.b16 %v397, %v396
    %v497 = vpack.c.b16 %v399, %v398
    %v498 = vpack.c.b16 %v401, %v400
    %v499 = vpack.c.b16 %v403, %v402
    %v500 = vpack.c.b16 %v405, %v404
    %v501 = vpack.c.b16 %v407, %v406
    %v502 = vpack.c.b16 %v409, %v408
    %v503 = vpack.c.b16 %v411, %v410
    %v504 = vpack.c.b16 %v413, %v412
    %v505 = vpack.c.b16 %v415, %v414
    %v506 = vpack.c.b16 %v417, %v416
    %v507 = vpack.c.b16 %v419, %v418
    %v508 = vpack.c.b16 %v421, %v420
    %v509 = vpack.c.b16 %v423, %v422
    %v510 = vpack.c.b16 %v425, %v424
    %v511 = vpack.c.b16 %v427, %v426
    %v512 = vpack.c.b16 %v429, %v428
    %v513 = vpack.c.b16 %v431, %v430
    %v514 = vpack.c.b16 %v433, %v432
    %v515 = vpack.c.b16 %v435, %v434
    %v516 = vpack.c.b16 %v437, %v436
    %v517 = vpack.c.b16 %v439, %v438
    %v518 = vpack.c.b16 %v441, %v440
    %v519 = vpack.c.b16 %v443, %v442
    %v520 = vpack.c.b16 %v445, %v444
    %v521 = vpack.c.b16 %v447, %v446
    %v522 = vpack.c.b16 %v449, %v448
    %v523 = vpack.c.b16 %v451, %v450
    %v524 = vpack.c.b16 %v453, %v452
    %v525 = vpack.c.b16 %v455, %v454
    %v526 = vpack.c.b16 %v457, %v456
    %v527 = vpack.c.b16 %v459, %v458
    %v528 = vpack.c.b16 %v461, %v460
    %v529 = vpack.c.b16 %v463, %v462
    %v530 = vpack.c.b16 %v465, %v464
    %v531 = vpack.c.b16 %v467, %v466
    %596 = vmatpush.bf16.msra.mxu0 %v475
    %597 = vmatpush.bf16.msra.mxu0 %v474
    %598 = vmatpush.bf16.msra.mxu0 %v473
    %599 = vmatpush.bf16.msra.mxu0 %v472
    %600 = vmatpush.bf16.msra.mxu0 %v471
    %601 = vmatpush.bf16.msra.mxu0 %v470
    %602 = vmatpush.bf16.msra.mxu0 %v469
    %603 = vmatpush.bf16.msra.mxu0 %v468
    %604 = vmatmul.bf16.gmra.mxu0 %v72
    %v605 = vpop.f32.mrf.mxu0
    %v606 = vadd.f32 %v210, %v605
    %v607 = vpop.f32.mrf.mxu0
    %608 = vdwg.mxu0
    %609 = vmatpush.bf16.msra.mxu0 %v483
    %610 = vmatpush.bf16.msra.mxu0 %v482
    %611 = vmatpush.bf16.msra.mxu0 %v481
    %612 = vmatpush.bf16.msra.mxu0 %v480
    %613 = vmatpush.bf16.msra.mxu0 %v479
    %614 = vmatpush.bf16.msra.mxu0 %v478
    %615 = vmatpush.bf16.msra.mxu0 %v477
    %616 = vmatpush.bf16.msra.mxu0 %v476
    %617 = vmatmul.bf16.gmra.mxu0 %v73
    %v618 = vpop.f32.mrf.mxu0
    %v619 = vadd.f32 %v606, %v618
    %v620 = vpop.f32.mrf.mxu0
    %621 = vdwg.mxu0
    %622 = vmatpush.bf16.msra.mxu0 %v491
    %623 = vmatpush.bf16.msra.mxu0 %v490
    %624 = vmatpush.bf16.msra.mxu0 %v489
    %625 = vmatpush.bf16.msra.mxu0 %v488
    %626 = vmatpush.bf16.msra.mxu0 %v487
    %627 = vmatpush.bf16.msra.mxu0 %v486
    %628 = vmatpush.bf16.msra.mxu0 %v485
    %629 = vmatpush.bf16.msra.mxu0 %v484
    %630 = vmatmul.bf16.gmra.mxu0 %v74
    %v631 = vpop.f32.mrf.mxu0
    %v632 = vadd.f32 %v619, %v631
    %v633 = vpop.f32.mrf.mxu0
    %634 = vdwg.mxu0
    %635 = vmatpush.bf16.msra.mxu0 %v499
    %636 = vmatpush.bf16.msra.mxu0 %v498
    %637 = vmatpush.bf16.msra.mxu0 %v497
    %638 = vmatpush.bf16.msra.mxu0 %v496
    %639 = vmatpush.bf16.msra.mxu0 %v495
    %640 = vmatpush.bf16.msra.mxu0 %v494
    %641 = vmatpush.bf16.msra.mxu0 %v493
    %642 = vmatpush.bf16.msra.mxu0 %v492
    %643 = vmatmul.bf16.gmra.mxu0 %v75
    %v644 = vpop.f32.mrf.mxu0
    %v645 = vadd.f32 %v632, %v644
    %v646 = vpop.f32.mrf.mxu0
    %647 = vdwg.mxu0
    %648 = vmatpush.bf16.msra.mxu0 %v507
    %649 = vmatpush.bf16.msra.mxu0 %v506
    %650 = vmatpush.bf16.msra.mxu0 %v505
    %651 = vmatpush.bf16.msra.mxu0 %v504
    %652 = vmatpush.bf16.msra.mxu0 %v503
    %653 = vmatpush.bf16.msra.mxu0 %v502
    %654 = vmatpush.bf16.msra.mxu0 %v501
    %655 = vmatpush.bf16.msra.mxu0 %v500
    %656 = vmatmul.bf16.gmra.mxu0 %v76
    %v657 = vpop.f32.mrf.mxu0
    %v658 = vadd.f32 %v645, %v657
    %v659 = vpop.f32.mrf.mxu0
    %660 = vdwg.mxu0
    %661 = vmatpush.bf16.msra.mxu0 %v515
    %662 = vmatpush.bf16.msra.mxu0 %v514
    %663 = vmatpush.bf16.msra.mxu0 %v513
    %664 = vmatpush.bf16.msra.mxu0 %v512
    %665 = vmatpush.bf16.msra.mxu0 %v511
    %666 = vmatpush.bf16.msra.mxu0 %v510
    %667 = vmatpush.bf16.msra.mxu0 %v509
    %668 = vmatpush.bf16.msra.mxu0 %v508
    %669 = vmatmul.bf16.gmra.mxu0 %v77
    %v670 = vpop.f32.mrf.mxu0
    %v671 = vadd.f32 %v658, %v670
    %v672 = vpop.f32.mrf.mxu0
    %673 = vdwg.mxu0
    %674 = vmatpush.bf16.msra.mxu0 %v523
    %675 = vmatpush.bf16.msra.mxu0 %v522
    %676 = vmatpush.bf16.msra.mxu0 %v521
    %677 = vmatpush.bf16.msra.mxu0 %v520
    %678 = vmatpush.bf16.msra.mxu0 %v519
    %679 = vmatpush.bf16.msra.mxu0 %v518
    %680 = vmatpush.bf16.msra.mxu0 %v517
    %681 = vmatpush.bf16.msra.mxu0 %v516
    %682 = vmatmul.bf16.gmra.mxu0 %v78
    %v683 = vpop.f32.mrf.mxu0
    %v684 = vadd.f32 %v671, %v683
    %v685 = vpop.f32.mrf.mxu0
    %686 = vdwg.mxu0
    %687 = vmatpush.bf16.msra.mxu0 %v531
    %688 = vmatpush.bf16.msra.mxu0 %v530
    %689 = vmatpush.bf16.msra.mxu0 %v529
    %690 = vmatpush.bf16.msra.mxu0 %v528
    %691 = vmatpush.bf16.msra.mxu0 %v527
    %692 = vmatpush.bf16.msra.mxu0 %v526
    %693 = vmatpush.bf16.msra.mxu0 %v525
    %694 = vmatpush.bf16.msra.mxu0 %v524
    %695 = vmatmul.bf16.gmra.mxu0 %v79
    %v696 = vpop.f32.mrf.mxu0
    %v697 = vadd.f32 %v684, %v696
    %v698 = vpop.f32.mrf.mxu0
    %699 = vdwg.mxu0
    %v700 = vmax.f32 %v697, 0.0
    %701 = vadd.xlane.f32.xlu0 %v700
    %v702 = vpop.xlane.xlu0 %701
    %v703 = vrcp.pop 128.0
    %v704 = vmul.f32 128.0, %v703
    %v705 = vsub.f32 1.0, %v704
    %v706 = vmul.f32 %v703, %v705
    %v707 = vadd.f32 %v703, %v706
    %vm708 = vweird.f32 %v703
    %v709 = vsel %vm708, %v703, %v707
    %v710 = vmul.f32 %v702, %v709
    %v711 = vsub.f32 %v700, %v710
    %v712 = vmul.f32 %v711, %v711
    %713 = vadd.xlane.f32.xlu0 %v712
    %v714 = vpop.xlane.xlu0 %713
    %v715 = vmul.f32 %v714, %v709
    %v716 = vadd.f32 %v715, 1e-05
    %v717 = vrsqrt.pop %v716
    %v718 = vmul.f32 %v717, %v716
    %v719 = vmul.f32 %v718, %v717
    %v720 = vmul.f32 0.5, %v719
    %v721 = vsub.f32 1.5, %v720
    %v722 = vmul.f32 %v717, %v721
    %vm723 = vweird.f32 %v716
    %vm724 = vweird.f32 %v717
    %vm725 = vmor %vm723, %vm724
    %v726 = vsel %vm725, %v717, %v722
    %v727 = vmul.f32 %v711, %v726
    %v728 = vld [vmem:[#allocation5] sm:$0x1]
    %v730 = vperm.slane %v728, 0
    %v732 = vmul.f32 %v727, %v730
    %v733 = vld [vmem:[%s4] sm:$0x1]
    %v735 = vperm.slane %v733, 0
    %v737 = vadd.f32 %v732, %v735
    %v738 = vpack.c.bf16 %v737, %v737
    %v739 = vld [vmem:[%s5] sm:$0xf]
    %v740 = vld [vmem:[%s5 + $0x4] sm:$0xf]
    %v741 = vld [vmem:[%s5 + $0x8] sm:$0xf]
    %v742 = vld [vmem:[%s5 + $0xc] sm:$0xf]
    %v743 = vld [vmem:[%s5 + $0x10] sm:$0xf]
    %v744 = vld [vmem:[%s5 + $0x14] sm:$0xf]
    %v745 = vld [vmem:[%s5 + $0x18] sm:$0xf]
    %v746 = vld [vmem:[%s5 + $0x1c] sm:$0xf]
    %v747 = vld [vmem:[%s5 + $0x20] sm:$0xf]
    %v748 = vld [vmem:[%s5 + $0x24] sm:$0xf]
    %v749 = vld [vmem:[%s5 + $0x28] sm:$0xf]
    %v750 = vld [vmem:[%s5 + $0x2c] sm:$0xf]
    %v751 = vld [vmem:[%s5 + $0x30] sm:$0xf]
    %v752 = vld [vmem:[%s5 + $0x34] sm:$0xf]
    %v753 = vld [vmem:[%s5 + $0x38] sm:$0xf]
    %v754 = vld [vmem:[%s5 + $0x3c] sm:$0xf]
    %v755 = vld [vmem:[%s6] sm:$0x1]
    %v757 = vperm.slane %v755, 0
    %v775 = vunpack.c.l.b16 %v739
    %v776 = vunpack.c.l.b16 %v740
    %v777 = vunpack.c.l.b16 %v741
    %v778 = vunpack.c.l.b16 %v742
    %v779 = vunpack.c.l.b16 %v743
    %v780 = vunpack.c.l.b16 %v744
    %v781 = vunpack.c.l.b16 %v745
    %v782 = vunpack.c.l.b16 %v746
    %v783 = vunpack.c.l.b16 %v747
    %v784 = vunpack.c.l.b16 %v748
    %v785 = vunpack.c.l.b16 %v749
    %v786 = vunpack.c.l.b16 %v750
    %v787 = vunpack.c.l.b16 %v751
    %v788 = vunpack.c.l.b16 %v752
    %v789 = vunpack.c.l.b16 %v753
    %v790 = vunpack.c.l.b16 %v754
    %v791 = vpack.c.b16 %v776, %v775
    %v792 = vpack.c.b16 %v778, %v777
    %v793 = vpack.c.b16 %v780, %v779
    %v794 = vpack.c.b16 %v782, %v781
    %v795 = vpack.c.b16 %v784, %v783
    %v796 = vpack.c.b16 %v786, %v785
    %v797 = vpack.c.b16 %v788, %v787
    %v798 = vpack.c.b16 %v790, %v789
    %807 = vmatpush.bf16.msra.mxu0 %v798
    %808 = vmatpush.bf16.msra.mxu0 %v797
    %809 = vmatpush.bf16.msra.mxu0 %v796
    %810 = vmatpush.bf16.msra.mxu0 %v795
    %811 = vmatpush.bf16.msra.mxu0 %v794
    %812 = vmatpush.bf16.msra.mxu0 %v793
    %813 = vmatpush.bf16.msra.mxu0 %v792
    %814 = vmatpush.bf16.msra.mxu0 %v791
    %815 = vmatmul.bf16.gmra.mxu0 %v738
    %v816 = vpop.f32.mrf.mxu0
    %v817 = vadd.f32 %v757, %v816
    %v818 = vpop.f32.mrf.mxu0
    %819 = vdwg.mxu0
    %v820 = vtanh.pop %v817
    %v821 = vpack.c.bf16 %v820, %v820
    %v822 = vld [vmem:[%s7] sm:$0xf]
    %v823 = vld [vmem:[%s7 + $0x4] sm:$0xf]
    %v824 = vld [vmem:[%s7 + $0x8] sm:$0xf]
    %v825 = vld [vmem:[%s7 + $0xc] sm:$0xf]
    %v826 = vld [vmem:[%s7 + $0x10] sm:$0xf]
    %v827 = vld [vmem:[%s7 + $0x14] sm:$0xf]
    %v828 = vld [vmem:[%s7 + $0x18] sm:$0xf]
    %v829 = vld [vmem:[%s7 + $0x1c] sm:$0xf]
    %v830 = vld [vmem:[%s8] sm:$0x1]
    %v832 = vperm.slane %v830, 0
    %v842 = vunpack.c.l.b16 %v822
    %v843 = vunpack.c.l.b16 %v823
    %v844 = vunpack.c.l.b16 %v824
    %v845 = vunpack.c.l.b16 %v825
    %v846 = vunpack.c.l.b16 %v826
    %v847 = vunpack.c.l.b16 %v827
    %v848 = vunpack.c.l.b16 %v828
    %v849 = vunpack.c.l.b16 %v829
    %v850 = vpack.c.b16 %v843, %v842
    %v851 = vpack.c.b16 %v845, %v844
    %v852 = vpack.c.b16 %v847, %v846
    %v853 = vpack.c.b16 %v849, %v848
    %vm858 = vcmask 523264
    %v860 = vsel %vm858, %v821, 0
    %862 = vmatpush.bf16.msra.mxu0 0
    %863 = vmatpush.bf16.msra.mxu0 0
    %864 = vmatpush.bf16.msra.mxu0 0
    %865 = vmatpush.bf16.msra.mxu0 0
    %866 = vmatpush.bf16.msra.mxu0 %v853
    %867 = vmatpush.bf16.msra.mxu0 %v852
    %868 = vmatpush.bf16.msra.mxu0 %v851
    %869 = vmatpush.bf16.msra.mxu0 %v850
    %870 = vmatmul.bf16.gmra.mxu0 %v860
    %v871 = vpop.f32.mrf.mxu0
    %v872 = vadd.f32 %v832, %v871
    %v873 = vpop.f32.mrf.mxu0
    %874 = vdwg.mxu0
    %875 = vst [vmem:[#allocation7] sm:$0xff] %v872
    // Predicated region
    $region46: #{tpu_custom_call.1} parent=1 // pred_check
      _
    $region47: #{tpu_custom_call.1} parent=1 // pred_check_branch
      %877 = sbr.rel (0) target = $region49
    $region48: #{tpu_custom_call.1} parent=1 // pred_region
      %879 = vsyncadd [#allocation4], 0
      %s881 = sshll.u32 [#allocation7], 4
      %s882 = int_to_ptr.vmem [resolvable:$true] %s881
      %s883 = sshll.u32 %s9, 4
      %s884 = int_to_ptr.hbm [resolvable:$true] %s883
      %886 = dma.vmem_to_hbm [thread:$0]  %s882, 128, %s884, [#allocation4]
    $region49: #{tpu_custom_call.1} parent=1 // pred_fallthru
      _
    // Predicated region
    $region50: #{tpu_custom_call.1} parent=1 // pred_check
      _
    $region51: #{tpu_custom_call.1} parent=1 // pred_check_branch
      %888 = sbr.rel (0) target = $region53
    $region52: #{tpu_custom_call.1} parent=1 // pred_region
      %890 = dma.done [#allocation4], 128
    $region53: #{tpu_custom_call.1} parent=1 // pred_fallthru
      _
    %891 = vsyncpa [#allocation3], 1
    %892 = vsyncpa [#allocation6], 1
    %893 = vsyncpa [#allocation4], 1

</llo_original>
